<compile_context>
chip_gen: v5e
topology: v5e:2x2
jax: 0.10.0
libtpu: 0.0.40
codegen_flags: <defaults>
</compile_context>

<pallas_src>
import jax
import jax.numpy as jnp
from jax.experimental import pallas as pl
from jax.experimental.pallas import tpu as pltpu


# ----------------------------------------------------------------------------
# Pallas kernel: scalar-ALU sum of L losses held in SMEM.
# ----------------------------------------------------------------------------
def _sum_losses_kernel(losses_ref, out_ref):
    # losses_ref: (L,) f32 in SMEM; out_ref: (1,) f32 in SMEM.
    # L is small and static, so a fully unrolled chain of scalar adds is
    # cheapest (2 scalar-ALU slots/cycle, ~3 cycles for L=5).
    L = losses_ref.shape[0]
    acc = losses_ref[0]
    for i in range(1, L):
        acc = acc + losses_ref[i]
    out_ref[0] = acc


def multi_loss_forward(loss_list):
    """Pallas equivalent of MultiLossLayer.forward: returns sum(loss_list)."""
    L = len(loss_list)
    assert L >= 1
    # Stack the scalar losses into a single small f32 vector (no padding, no
    # dynamic-update-slice: SMEM has no (8,128) tiling constraint).
    losses = jnp.stack([jnp.asarray(l, jnp.float32).reshape(()) for l in loss_list])

    out = pl.pallas_call(
        _sum_losses_kernel,
        out_shape=jax.ShapeDtypeStruct((1,), jnp.float32),
        in_specs=[pl.BlockSpec(memory_space=pltpu.MemorySpace.SMEM)],
        out_specs=pl.BlockSpec(memory_space=pltpu.MemorySpace.SMEM),
    )(losses)
    return out[0]


# ----------------------------------------------------------------------------
# Deterministic parameter init (shapes from __init__: five scalars w1..w5).
# They are unused by forward(), mirroring the PyTorch module exactly.
# ----------------------------------------------------------------------------
def init_multi_loss_params(key):
    k1, k2, k3, k4, k5 = jax.random.split(key, 5)
    params = {
        "w1": jax.random.uniform(k1, (1,), jnp.float32, 0.3, 0.5),
        "w2": jax.random.uniform(k2, (1,), jnp.float32, 0.9, 1.0),
        "w3": jax.random.uniform(k3, (1,), jnp.float32, 0.9, 1.0),
        "w4": jax.random.uniform(k4, (1,), jnp.float32, 0.1, 0.3),
        "w5": jax.random.uniform(k5, (1,), jnp.float32, 0.8, 0.9),
    }
    return params


if __name__ == "__main__":
    key = jax.random.PRNGKey(0)
    pkey, lkey = jax.random.split(key)

    # Parameters (unused in forward, as in the reference module).
    _params = init_multi_loss_params(pkey)

    # Five deterministic scalar "losses" (loss_list_len = 5).
    loss_vals = jax.random.uniform(lkey, (5,), jnp.float32, 0.0, 2.0)
    loss_list = [loss_vals[i] for i in range(5)]

    result = multi_loss_forward(loss_list)
    result = jax.block_until_ready(result)

    # Reference check in plain JAX.
    ref = jnp.sum(loss_vals)
    assert jnp.allclose(result, ref, rtol=1e-6, atol=1e-6), (result, ref)

    print("KERNEL_OK")
</pallas_src>

<mosaic_0001>
module attributes {stable_mosaic.version = 11 : i64} {
  func.func @_sum_losses_kernel(%arg0: memref<5xf32, #tpu.memory_space<smem>>, %arg1: memref<1xf32, #tpu.memory_space<smem>>) attributes {dimension_semantics = [], scalar_prefetch = 0 : i64, scratch_operands = 0 : i64, tpu.core_type = #tpu.core_type<tc>} {
    %c0 = arith.constant 0 : index
    %0 = memref.load %arg0[%c0] : memref<5xf32, #tpu.memory_space<smem>>
    %c1 = arith.constant 1 : index
    %1 = memref.load %arg0[%c1] : memref<5xf32, #tpu.memory_space<smem>>
    %2 = arith.addf %0, %1 : f32
    %c2 = arith.constant 2 : index
    %3 = memref.load %arg0[%c2] : memref<5xf32, #tpu.memory_space<smem>>
    %4 = arith.addf %2, %3 : f32
    %c3 = arith.constant 3 : index
    %5 = memref.load %arg0[%c3] : memref<5xf32, #tpu.memory_space<smem>>
    %6 = arith.addf %4, %5 : f32
    %c4 = arith.constant 4 : index
    %7 = memref.load %arg0[%c4] : memref<5xf32, #tpu.memory_space<smem>>
    %8 = arith.addf %6, %7 : f32
    %c0_0 = arith.constant 0 : index
    %9 = memref.load %arg1[%c0_0] : memref<1xf32, #tpu.memory_space<smem>>
    memref.store %8, %arg1[%c0_0] : memref<1xf32, #tpu.memory_space<smem>>
    return
  }
}

</mosaic_0001>

<llo_original>
// kernel: tpu_custom_call.1
$region0: #{tpu_custom_call.1}
  #allocation0 [shape = 'u32[]', space=smem, size = 0x4, offset = 0x4, fixed_abs, tag = 'smem constant byte address 0x4 - core index']
  #allocation1 [shape = 'u32[72,128]{1,0:T(1,128)}', space=vmem, size = 0x9000, scoped, tag = 'internal scratch']
  %s0 = inlined_call_operand.hbm [shape: f32[5], index: 0, kind: input, shape index: {}]
  %s1 = inlined_call_operand.hbm [shape: f32[1], index: 1, kind: output, shape index: {}]
  %s2 = sld [smem:[#allocation0]]
  $region18: #{tpu_custom_call.1} parent=0
    _
  %s4 = ssub.s32 1, %s2
  %s5 = scalar_select 0, %s4, %s2
  $region1: #{tpu_custom_call.1} parent=0
    #allocation2 [shape = 'u8[512]{0}', space=smem, size = 0x200, scoped, tag = 'input window, operand 0, single buffered']
    #allocation3 [shape = 's32[1]{0}', space=sflag, size = 0x4, scoped, tag = 'scoped memory for tpu_custom_call.1']
    #allocation4 [shape = 's32[1]{0}', space=sflag, size = 0x4, scoped, tag = 'scoped memory for tpu_custom_call.1']
    #allocation5 [shape = 'u8[512]{0}', space=smem, size = 0x200, scoped, tag = 'output window, operand 0, single buffered']
    %6 = vsyncpa [#allocation3], 0
    %7 = vsyncpa [#allocation4], 0
    // Predicated region
    $region2: #{tpu_custom_call.1} parent=1 // pred_check
      _
    $region3: #{tpu_custom_call.1} parent=1 // pred_check_branch
      %9 = sbr.rel (0) target = $region5
    $region4: #{tpu_custom_call.1} parent=1 // pred_region
      %11 = vsyncadd [#allocation3], 0
      %s13 = sshll.u32 %s0, 4
      %s14 = int_to_ptr.hbm [resolvable:$true] %s13
      %16 = dma.hbm_to_smem %s14, 16, [#allocation2], [#allocation3]
    $region5: #{tpu_custom_call.1} parent=1 // pred_fallthru
      _
    // Predicated region
    $region6: #{tpu_custom_call.1} parent=1 // pred_check
      _
    $region7: #{tpu_custom_call.1} parent=1 // pred_check_branch
      %18 = sbr.rel (0) target = $region9
    $region8: #{tpu_custom_call.1} parent=1 // pred_region
      %20 = dma.done [#allocation3], 16
    $region9: #{tpu_custom_call.1} parent=1 // pred_fallthru
      _
    %21 = sfence
    %s22 = sld [smem:[#allocation2]]
    %s23 = sld [smem:[#allocation2 + $0x1]]
    %s24 = sadd.f32 %s22, %s23
    %s25 = sld [smem:[#allocation2 + $0x2]]
    %s26 = sadd.f32 %s24, %s25
    %s27 = sld [smem:[#allocation2 + $0x3]]
    %s28 = sadd.f32 %s26, %s27
    %s29 = sld [smem:[#allocation2 + $0x4]]
    %s30 = sadd.f32 %s28, %s29
    %s31 = scalar_lea.smem [#allocation5], 0
    %32 = sst [smem:[%s31]] %s30
    // Predicated region
    $region10: #{tpu_custom_call.1} parent=1 // pred_check
      _
    $region11: #{tpu_custom_call.1} parent=1 // pred_check_branch
      %34 = sbr.rel (0) target = $region13
    $region12: #{tpu_custom_call.1} parent=1 // pred_region
      %36 = vsyncadd [#allocation4], 0
      %s38 = sshll.u32 %s1, 4
      %s39 = int_to_ptr.hbm [resolvable:$true] %s38
      %41 = dma.smem_to_hbm [#allocation5], 16, %s39, [#allocation4]
    $region13: #{tpu_custom_call.1} parent=1 // pred_fallthru
      _
    // Predicated region
    $region14: #{tpu_custom_call.1} parent=1 // pred_check
      _
    $region15: #{tpu_custom_call.1} parent=1 // pred_check_branch
      %43 = sbr.rel (0) target = $region17
    $region16: #{tpu_custom_call.1} parent=1 // pred_region
      %45 = dma.done [#allocation4], 16
    $region17: #{tpu_custom_call.1} parent=1 // pred_fallthru
      _
    %46 = sfence
    %47 = vsyncpa [#allocation3], 1
    %48 = vsyncpa [#allocation4], 1

</llo_original>
